<compile_context>
chip_gen: v7x
topology: tpu7x:2x2x1
jax: 0.10.0
libtpu: 0.0.40
codegen_flags: <defaults>
</compile_context>

<pallas_src>
import functools

import jax
import jax.numpy as jnp
import numpy as np
from jax.experimental import pallas as pl
from jax.experimental.pallas import tpu as pltpu


def _graph_nonlocal_kernel(x_ref, w_fused_ref, b_theta_ref, pool_perm_ref,
                           b_pg_ref, w_out_ref, shift_ref, o_ref,
                           *, group_size, inter_dim):
    """One batch-block per grid step: fused convs, permuted max-pool, attention,
    output conv + folded BN + residual."""
    bblk, n_nodes, hid = x_ref.shape
    ci = inter_dim
    n_pool = n_nodes // group_size

    x_f32 = x_ref[...]                                       # (Bblk, N, C) f32
    x_flat = x_f32.reshape(bblk * n_nodes, hid)              # (Bblk*N, C)
    x_bf = x_flat.astype(jnp.bfloat16)

    # Fused theta/phi/g 1x1 convs: one MXU matmul, f32 accumulation.
    # theta's weights/bias already carry the 1/N' attention normalization.
    proj = jnp.dot(x_bf, w_fused_ref[...],
                   preferred_element_type=jnp.float32)       # (Bblk*N, 3Ci)
    proj = proj.reshape(bblk, n_nodes, 3 * ci)

    theta = proj[:, :, :ci] + b_theta_ref[...]               # (Bblk, N, Ci) f32
    phig = proj[:, :, ci:]                                   # (Bblk, N, 2Ci)

    # Grouped-order selection folded into a small permutation matmul so the
    # maxpool becomes a maximum tree over CONTIGUOUS sublane slices:
    # row (k*N' + m) of pool_perm one-hot-selects node grouped_order[m*gs + k].
    p_b = jnp.broadcast_to(pool_perm_ref[...][None],
                           (bblk, n_nodes, n_nodes))         # bf16, tiny
    phig_sel = jnp.einsum('brn,bnc->brc', p_b, phig.astype(jnp.bfloat16),
                          preferred_element_type=jnp.float32)

    pooled = phig_sel[:, 0:n_pool, :]
    for k in range(1, group_size):
        pooled = jnp.maximum(
            pooled, phig_sel[:, k * n_pool:(k + 1) * n_pool, :])
    # max is shift-invariant per channel -> phi/g biases added after pooling
    # on the (N', 2Ci) slab instead of the (N, Ci) ones.
    pooled = (pooled + b_pg_ref[...]).astype(jnp.bfloat16)   # (Bblk, N', 2Ci)
    phi_p = pooled[:, :, :ci]
    g_p = pooled[:, :, ci:]

    # f = theta @ phi_p^T (already includes 1/N'), y = f @ g_p — batched MXU.
    f = jnp.einsum('bni,bmi->bnm', theta.astype(jnp.bfloat16), phi_p,
                   preferred_element_type=jnp.float32)       # (Bblk, N, N')
    y = jnp.einsum('bnm,bmi->bni', f.astype(jnp.bfloat16), g_p,
                   preferred_element_type=jnp.float32)       # (Bblk, N, Ci)

    # Output 1x1 conv with BN scale folded into the weights, combined shift,
    # and residual.  Elementwise tail in f32; single downcast at the store.
    y_flat = y.reshape(bblk * n_nodes, ci).astype(jnp.bfloat16)
    w_y = jnp.dot(y_flat, w_out_ref[...],
                  preferred_element_type=jnp.float32)        # (Bblk*N, C)
    out = w_y + shift_ref[...] + x_flat
    o_ref[...] = out.reshape(bblk, n_nodes, hid).astype(o_ref.dtype)


def _pick_batch_block(batch, n_nodes):
    """Block enough batch elements per step to fill >=128 matmul rows, while
    keeping >=2 grid steps (v7x megacore) when the batch size allows both."""
    target = max(1, pl.cdiv(128, n_nodes))
    bblk = min(batch, target)
    while bblk > 1 and batch // bblk < 2 and (bblk // 2) * n_nodes >= 128:
        bblk //= 2
    while batch % bblk:          # blocks must tile the batch exactly
        bblk -= 1
    return bblk


def graph_nonlocal(x, grouped_order, restored_order, group_size, params):
    """x: (B, N, C) float32.  Returns (B, N, C)."""
    B, N, C = x.shape
    Ci = params["w_theta"].shape[0]
    assert N % group_size == 0, "node count must be divisible by group_size"
    n_pool = N // group_size

    go = np.asarray(jax.device_get(grouped_order)).astype(np.int64)
    ro = np.asarray(jax.device_get(restored_order)).astype(np.int64)
    # The x[:, go] / z[:, ro] HBM gathers were folded away analytically; that
    # is only valid when restored_order inverts grouped_order (it does in the
    # module by construction).
    assert np.array_equal(go[ro], np.arange(N)), \
        "restored_order must be the inverse permutation of grouped_order"

    # Permutation-for-pooling matrix: row (k*N' + m) selects node go[m*gs + k],
    # so a maximum tree over contiguous N'-row slices reproduces
    # MaxPool1d(group_size) applied to the grouped-order node sequence.
    rows = np.arange(N)
    k_idx, m_idx = rows // n_pool, rows % n_pool
    sel = go[m_idx * group_size + k_idx]
    pool_perm_np = np.zeros((N, N), np.float32)
    pool_perm_np[rows, sel] = 1.0

    # Constant folding (trace-time, free).
    inv_np = np.float32(1.0 / n_pool)
    w_fused = jnp.concatenate(
        [params["w_theta"].T * inv_np, params["w_phi"].T, params["w_g"].T],
        axis=1).astype(jnp.bfloat16)                                   # (C, 3Ci)
    b_theta = (params["b_theta"] * inv_np).reshape(1, Ci).astype(jnp.float32)
    b_pg = jnp.concatenate(
        [params["b_phi"], params["b_g"]]).reshape(1, 2 * Ci).astype(jnp.float32)
    w_out = (params["w_w"].T * params["bn_scale"][None, :]).astype(jnp.bfloat16)
    shift = (params["b_w"] * params["bn_scale"]
             + params["bn_shift"]).reshape(1, C).astype(jnp.float32)
    pool_perm = jnp.asarray(pool_perm_np, dtype=jnp.bfloat16)

    bblk = _pick_batch_block(B, N)
    grid = (B // bblk,)

    kernel = functools.partial(_graph_nonlocal_kernel,
                               group_size=group_size, inter_dim=Ci)
    weights = (w_fused, b_theta, pool_perm, b_pg, w_out, shift)

    return pl.pallas_call(
        kernel,
        out_shape=jax.ShapeDtypeStruct((B, N, C), x.dtype),
        grid_spec=pltpu.PrefetchScalarGridSpec(
            num_scalar_prefetch=0,
            grid=grid,
            in_specs=[pl.BlockSpec((bblk, N, C), lambda b: (b, 0, 0))]
                    + [pl.BlockSpec(w.shape, lambda b: (0, 0)) for w in weights],
            out_specs=pl.BlockSpec((bblk, N, C), lambda b: (b, 0, 0)),
        ),
        input_output_aliases={0: 0},   # residual input tile read once -> alias
        compiler_params=pltpu.CompilerParams(
            dimension_semantics=("parallel",)),
    )(x, *weights)


def graph_nonlocal_reference(x, grouped_order, restored_order, group_size, p):
    """Pure-JAX reference mirroring the PyTorch forward (ground truth)."""
    xg = x[:, grouped_order, :]
    conv = lambda v, w, b: jnp.einsum('bnc,ic->bni', v, w) + b
    theta = conv(xg, p["w_theta"], p["b_theta"])
    phi = conv(xg, p["w_phi"], p["b_phi"])
    g = conv(xg, p["w_g"], p["b_g"])
    B, N, C = xg.shape
    Np = N // group_size
    phi_p = jnp.max(phi.reshape(B, Np, group_size, -1), axis=2)
    g_p = jnp.max(g.reshape(B, Np, group_size, -1), axis=2)
    f = jnp.einsum('bni,bmi->bnm', theta, phi_p) / Np
    y = jnp.einsum('bnm,bmi->bni', f, g_p)
    w_y = jnp.einsum('bni,ci->bnc', y, p["w_w"]) + p["b_w"]
    w_y = w_y * p["bn_scale"] + p["bn_shift"]
    z = w_y + xg
    return z[:, restored_order, :]


if __name__ == "__main__":
    B, N, HID, GROUP = 2, 16, 32, 4          # hid_dim=32, 16 graph nodes, groups of 4
    CI = HID // 2                             # inter_channels = hid_dim // 2

    key = jax.random.PRNGKey(0)
    ks = jax.random.split(key, 12)

    x = jax.random.normal(ks[0], (B, N, HID), dtype=jnp.float32)

    # Deterministic node grouping permutation + its inverse.
    grouped_order = jnp.arange(N).reshape(GROUP, N // GROUP).T.reshape(-1)
    restored_order = jnp.argsort(grouped_order)

    params = {
        "w_theta": 0.1 * jax.random.normal(ks[1], (CI, HID), dtype=jnp.float32),
        "b_theta": 0.1 * jax.random.normal(ks[2], (CI,), dtype=jnp.float32),
        "w_phi":   0.1 * jax.random.normal(ks[3], (CI, HID), dtype=jnp.float32),
        "b_phi":   0.1 * jax.random.normal(ks[4], (CI,), dtype=jnp.float32),
        "w_g":     0.1 * jax.random.normal(ks[5], (CI, HID), dtype=jnp.float32),
        "b_g":     0.1 * jax.random.normal(ks[6], (CI,), dtype=jnp.float32),
        "w_w":     0.1 * jax.random.normal(ks[7], (HID, CI), dtype=jnp.float32),
        "b_w":     0.1 * jax.random.normal(ks[8], (HID,), dtype=jnp.float32),
        # Eval-mode BatchNorm1d folded to per-channel affine (nonzero values so
        # the whole path is exercised; original code inits gamma/beta to zero).
        "bn_scale": 1.0 + 0.1 * jax.random.normal(ks[9], (HID,), dtype=jnp.float32),
        "bn_shift": 0.1 * jax.random.normal(ks[10], (HID,), dtype=jnp.float32),
    }

    # Reference first (the kernel call aliases x's output buffer).
    ref = graph_nonlocal_reference(x, grouped_order, restored_order, GROUP, params)
    ref = jax.block_until_ready(ref)

    out = graph_nonlocal(x, grouped_order, restored_order, GROUP, params)
    out = jax.block_until_ready(out)

    # Tolerance accounts for bf16 MXU operands (f32 accumulation).
    np.testing.assert_allclose(np.asarray(out), np.asarray(ref),
                               rtol=2e-2, atol=2e-2)
    assert out.shape == (B, N, HID)
    print("KERNEL_OK")
</pallas_src>

<mosaic_0001>
module attributes {stable_mosaic.version = 11 : i64} {
  func.func @_graph_nonlocal_kernel(%arg0: i32, %arg1: memref<2x16x32xf32, #tpu.memory_space<vmem>>, %arg2: memref<32x48xbf16, #tpu.memory_space<vmem>>, %arg3: memref<1x16xf32, #tpu.memory_space<vmem>>, %arg4: memref<16x16xbf16, #tpu.memory_space<vmem>>, %arg5: memref<1x32xf32, #tpu.memory_space<vmem>>, %arg6: memref<16x32xbf16, #tpu.memory_space<vmem>>, %arg7: memref<1x32xf32, #tpu.memory_space<vmem>>, %arg8: memref<2x16x32xf32, #tpu.memory_space<vmem>>) attributes {dimension_semantics = [#tpu.dimension_semantics<parallel>], iteration_bounds = array<i64: 1>, scalar_prefetch = 0 : i64, scratch_operands = 0 : i64, tpu.core_type = #tpu.core_type<tc>, window_params = [{transform_indices = @transform_0, window_bounds = array<i64: 2, 16, 32>}, {pipeline_mode = #tpu.pipeline_mode<synchronous>, transform_indices = @transform_1, window_bounds = array<i64: 32, 48>}, {pipeline_mode = #tpu.pipeline_mode<synchronous>, transform_indices = @transform_2, window_bounds = array<i64: 1, 16>}, {pipeline_mode = #tpu.pipeline_mode<synchronous>, transform_indices = @transform_3, window_bounds = array<i64: 16, 16>}, {pipeline_mode = #tpu.pipeline_mode<synchronous>, transform_indices = @transform_4, window_bounds = array<i64: 1, 32>}, {pipeline_mode = #tpu.pipeline_mode<synchronous>, transform_indices = @transform_5, window_bounds = array<i64: 16, 32>}, {pipeline_mode = #tpu.pipeline_mode<synchronous>, transform_indices = @transform_6, window_bounds = array<i64: 1, 32>}, {transform_indices = @transform_7, window_bounds = array<i64: 2, 16, 32>}]} {
    %c0 = arith.constant 0 : index
    %c0_0 = arith.constant 0 : index
    %c0_1 = arith.constant 0 : index
    %0 = vector.load %arg1[%c0, %c0_0, %c0_1] : memref<2x16x32xf32, #tpu.memory_space<vmem>>, vector<2x16x32xf32>
    %1 = vector.shape_cast %0 : vector<2x16x32xf32> to vector<32x32xf32>
    %2 = arith.truncf %1 : vector<32x32xf32> to vector<32x32xbf16>
    %c0_2 = arith.constant 0 : index
    %c0_3 = arith.constant 0 : index
    %3 = vector.load %arg2[%c0_2, %c0_3] : memref<32x48xbf16, #tpu.memory_space<vmem>>, vector<32x48xbf16>
    %cst = arith.constant dense<0.000000e+00> : vector<32x48xf32>
    %4 = tpu.matmul %2, %3, %cst {dimension_numbers = #tpu.dot_dimension_numbers<[1], [0], [0], [1], [0, 0, 1, 1], [], []>} : vector<32x32xbf16>, vector<32x48xbf16>, vector<32x48xf32> -> vector<32x48xf32>
    %5 = vector.shape_cast %4 : vector<32x48xf32> to vector<2x16x48xf32>
    %6 = vector.extract_strided_slice %5 {offsets = [0, 0, 0], sizes = [2, 16, 16], strides = [1, 1, 1]} : vector<2x16x48xf32> to vector<2x16x16xf32>
    %c0_4 = arith.constant 0 : index
    %c0_5 = arith.constant 0 : index
    %7 = vector.load %arg3[%c0_4, %c0_5] : memref<1x16xf32, #tpu.memory_space<vmem>>, vector<1x16xf32>
    %8 = vector.shape_cast %7 : vector<1x16xf32> to vector<1x1x16xf32>
    %9 = vector.broadcast %8 : vector<1x1x16xf32> to vector<2x16x16xf32>
    %10 = arith.addf %6, %9 : vector<2x16x16xf32>
    %11 = vector.extract_strided_slice %5 {offsets = [0, 0, 16], sizes = [2, 16, 32], strides = [1, 1, 1]} : vector<2x16x48xf32> to vector<2x16x32xf32>
    %c0_6 = arith.constant 0 : index
    %c0_7 = arith.constant 0 : index
    %12 = vector.load %arg4[%c0_6, %c0_7] : memref<16x16xbf16, #tpu.memory_space<vmem>>, vector<16x16xbf16>
    %13 = vector.shape_cast %12 : vector<16x16xbf16> to vector<1x16x16xbf16>
    %14 = vector.shape_cast %13 : vector<1x16x16xbf16> to vector<1x16x16xbf16>
    %15 = vector.broadcast %14 : vector<1x16x16xbf16> to vector<2x16x16xbf16>
    %16 = arith.truncf %11 : vector<2x16x32xf32> to vector<2x16x32xbf16>
    "tpu.trace_start"() <{level = 10 : i32, message = "brn,bnc->brc"}> : () -> ()
    %cst_8 = arith.constant dense<0.000000e+00> : vector<2x16x32xf32>
    %17 = tpu.matmul %15, %16, %cst_8 {dimension_numbers = #tpu.dot_dimension_numbers<[2], [1], [1], [2], [0, 0, 0, 1, 1, 2], [0], [0]>} : vector<2x16x16xbf16>, vector<2x16x32xbf16>, vector<2x16x32xf32> -> vector<2x16x32xf32>
    "tpu.trace_stop"() : () -> ()
    %18 = vector.extract_strided_slice %17 {offsets = [0, 0, 0], sizes = [2, 4, 32], strides = [1, 1, 1]} : vector<2x16x32xf32> to vector<2x4x32xf32>
    %19 = vector.extract_strided_slice %17 {offsets = [0, 4, 0], sizes = [2, 4, 32], strides = [1, 1, 1]} : vector<2x16x32xf32> to vector<2x4x32xf32>
    %20 = arith.maximumf %18, %19 : vector<2x4x32xf32>
    %21 = vector.extract_strided_slice %17 {offsets = [0, 8, 0], sizes = [2, 4, 32], strides = [1, 1, 1]} : vector<2x16x32xf32> to vector<2x4x32xf32>
    %22 = arith.maximumf %20, %21 : vector<2x4x32xf32>
    %23 = vector.extract_strided_slice %17 {offsets = [0, 12, 0], sizes = [2, 4, 32], strides = [1, 1, 1]} : vector<2x16x32xf32> to vector<2x4x32xf32>
    %24 = arith.maximumf %22, %23 : vector<2x4x32xf32>
    %c0_9 = arith.constant 0 : index
    %c0_10 = arith.constant 0 : index
    %25 = vector.load %arg5[%c0_9, %c0_10] : memref<1x32xf32, #tpu.memory_space<vmem>>, vector<1x32xf32>
    %26 = vector.shape_cast %25 : vector<1x32xf32> to vector<1x1x32xf32>
    %27 = vector.broadcast %26 : vector<1x1x32xf32> to vector<2x4x32xf32>
    %28 = arith.addf %24, %27 : vector<2x4x32xf32>
    %29 = arith.truncf %28 : vector<2x4x32xf32> to vector<2x4x32xbf16>
    %30 = vector.extract_strided_slice %29 {offsets = [0, 0, 0], sizes = [2, 4, 16], strides = [1, 1, 1]} : vector<2x4x32xbf16> to vector<2x4x16xbf16>
    %31 = vector.extract_strided_slice %29 {offsets = [0, 0, 16], sizes = [2, 4, 16], strides = [1, 1, 1]} : vector<2x4x32xbf16> to vector<2x4x16xbf16>
    %32 = arith.truncf %10 : vector<2x16x16xf32> to vector<2x16x16xbf16>
    "tpu.trace_start"() <{level = 10 : i32, message = "bni,bmi->bnm"}> : () -> ()
    %cst_11 = arith.constant dense<0.000000e+00> : vector<2x16x4xf32>
    %33 = tpu.matmul %32, %30, %cst_11 {dimension_numbers = #tpu.dot_dimension_numbers<[2], [2], [1], [1], [0, 0, 0, 1, 1, 1], [0], [0]>} : vector<2x16x16xbf16>, vector<2x4x16xbf16>, vector<2x16x4xf32> -> vector<2x16x4xf32>
    "tpu.trace_stop"() : () -> ()
    %34 = arith.truncf %33 : vector<2x16x4xf32> to vector<2x16x4xbf16>
    "tpu.trace_start"() <{level = 10 : i32, message = "bnm,bmi->bni"}> : () -> ()
    %cst_12 = arith.constant dense<0.000000e+00> : vector<2x16x16xf32>
    %35 = tpu.matmul %34, %31, %cst_12 {dimension_numbers = #tpu.dot_dimension_numbers<[2], [1], [1], [2], [0, 0, 0, 1, 1, 2], [0], [0]>} : vector<2x16x4xbf16>, vector<2x4x16xbf16>, vector<2x16x16xf32> -> vector<2x16x16xf32>
    "tpu.trace_stop"() : () -> ()
    %36 = vector.shape_cast %35 : vector<2x16x16xf32> to vector<32x16xf32>
    %37 = arith.truncf %36 : vector<32x16xf32> to vector<32x16xbf16>
    %c0_13 = arith.constant 0 : index
    %c0_14 = arith.constant 0 : index
    %38 = vector.load %arg6[%c0_13, %c0_14] : memref<16x32xbf16, #tpu.memory_space<vmem>>, vector<16x32xbf16>
    %cst_15 = arith.constant dense<0.000000e+00> : vector<32x32xf32>
    %39 = tpu.matmul %37, %38, %cst_15 {dimension_numbers = #tpu.dot_dimension_numbers<[1], [0], [0], [1], [0, 0, 1, 1], [], []>} : vector<32x16xbf16>, vector<16x32xbf16>, vector<32x32xf32> -> vector<32x32xf32>
    %c0_16 = arith.constant 0 : index
    %c0_17 = arith.constant 0 : index
    %40 = vector.load %arg7[%c0_16, %c0_17] : memref<1x32xf32, #tpu.memory_space<vmem>>, vector<1x32xf32>
    %41 = vector.broadcast %40 : vector<1x32xf32> to vector<32x32xf32>
    %42 = arith.addf %39, %41 : vector<32x32xf32>
    %43 = arith.addf %42, %1 : vector<32x32xf32>
    %44 = vector.shape_cast %43 : vector<32x32xf32> to vector<2x16x32xf32>
    %c0_18 = arith.constant 0 : index
    %c0_19 = arith.constant 0 : index
    %c0_20 = arith.constant 0 : index
    %45 = vector.load %arg8[%c0_18, %c0_19, %c0_20] : memref<2x16x32xf32, #tpu.memory_space<vmem>>, vector<2x16x32xf32>
    tpu.vector_store %arg8[%c0_18, %c0_19, %c0_20], %44 {strides = array<i32>} : memref<2x16x32xf32, #tpu.memory_space<vmem>>, vector<2x16x32xf32>,
    return
  }
  func.func @transform_0(%arg0: i32) -> (i32, i32, i32) {
    %c0_i32 = arith.constant 0 : i32
    %c0_i32_0 = arith.constant 0 : i32
    %c0_i32_1 = arith.constant 0 : i32
    return %arg0, %c0_i32, %c0_i32_0 : i32, i32, i32
  }
  func.func @transform_1(%arg0: i32) -> (i32, i32) {
    %c0_i32 = arith.constant 0 : i32
    %c0_i32_0 = arith.constant 0 : i32
    %c0_i32_1 = arith.constant 0 : i32
    return %c0_i32, %c0_i32_0 : i32, i32
  }
  func.func @transform_2(%arg0: i32) -> (i32, i32) {
    %c0_i32 = arith.constant 0 : i32
    %c0_i32_0 = arith.constant 0 : i32
    %c0_i32_1 = arith.constant 0 : i32
    return %c0_i32, %c0_i32_0 : i32, i32
  }
  func.func @transform_3(%arg0: i32) -> (i32, i32) {
    %c0_i32 = arith.constant 0 : i32
    %c0_i32_0 = arith.constant 0 : i32
    %c0_i32_1 = arith.constant 0 : i32
    return %c0_i32, %c0_i32_0 : i32, i32
  }
  func.func @transform_4(%arg0: i32) -> (i32, i32) {
    %c0_i32 = arith.constant 0 : i32
    %c0_i32_0 = arith.constant 0 : i32
    %c0_i32_1 = arith.constant 0 : i32
    return %c0_i32, %c0_i32_0 : i32, i32
  }
  func.func @transform_5(%arg0: i32) -> (i32, i32) {
    %c0_i32 = arith.constant 0 : i32
    %c0_i32_0 = arith.constant 0 : i32
    %c0_i32_1 = arith.constant 0 : i32
    return %c0_i32, %c0_i32_0 : i32, i32
  }
  func.func @transform_6(%arg0: i32) -> (i32, i32) {
    %c0_i32 = arith.constant 0 : i32
    %c0_i32_0 = arith.constant 0 : i32
    %c0_i32_1 = arith.constant 0 : i32
    return %c0_i32, %c0_i32_0 : i32, i32
  }
  func.func @transform_7(%arg0: i32) -> (i32, i32, i32) {
    %c0_i32 = arith.constant 0 : i32
    %c0_i32_0 = arith.constant 0 : i32
    %c0_i32_1 = arith.constant 0 : i32
    return %arg0, %c0_i32, %c0_i32_0 : i32, i32, i32
  }
}

</mosaic_0001>

<llo_original>
// kernel: tpu_custom_call.1
$region0: #{tpu_custom_call.1}
  #allocation0 [shape = 'u32[]', space=smem, size = 0x4, offset = 0x4, fixed_abs, tag = 'smem constant byte address 0x4 - core index']
  #allocation1 [shape = 'u32[144,128]{1,0:T(1,128)}', space=vmem, size = 0x12000, scoped, tag = 'internal scratch']
  %s0 = inlined_call_operand.hbm [shape: f32[2,16,32], index: 0, kind: input, shape index: {}, may-alias: {0,7}]
  %s1 = inlined_call_operand.vmem [shape: bf16[32,48], index: 1, kind: input, shape index: {}]
  %s2 = inlined_call_operand.vmem [shape: f32[1,16], index: 2, kind: input, shape index: {}]
  %s3 = inlined_call_operand.vmem [shape: bf16[16,16], index: 3, kind: input, shape index: {}]
  %s4 = inlined_call_operand.vmem [shape: f32[1,32], index: 4, kind: input, shape index: {}]
  %s5 = inlined_call_operand.vmem [shape: bf16[16,32], index: 5, kind: input, shape index: {}]
  %s6 = inlined_call_operand.vmem [shape: f32[1,32], index: 6, kind: input, shape index: {}]
  %s7 = inlined_call_operand.hbm [shape: f32[2,16,32], index: 7, kind: output, shape index: {}, may-alias: {0,7}]
  %s8 = sld [smem:[#allocation0]]
  $region42: #{tpu_custom_call.1} parent=0
    _
  %s10 = ssub.s32 1, %s8
  %s11 = scalar_select 0, %s10, %s8
  $region1: #{tpu_custom_call.1} parent=0
    #allocation2 [shape = 'u8[16384]{0}', space=vmem, size = 0x4000, scoped, tag = 'input window, operand 0, single buffered']
    #allocation3 [shape = 's32[1]{0}', space=sflag, size = 0x4, scoped, tag = 'scoped memory for tpu_custom_call.1']
    #allocation4 [shape = 's32[1]{0}', space=sflag, size = 0x4, scoped, tag = 'scoped memory for tpu_custom_call.1']
    #allocation5 [shape = 'u8[16384]{0}', space=vmem, size = 0x4000, scoped, tag = 'output window, operand 0, single buffered']
    %12 = vsyncpa [#allocation3], 0
    %13 = vsyncpa [#allocation4], 0
    // Predicated region
    $region2: #{tpu_custom_call.1} parent=1 // pred_check
      _
    $region3: #{tpu_custom_call.1} parent=1 // pred_check_branch
      %15 = sbr.rel (0) target = $region5
    $region4: #{tpu_custom_call.1} parent=1 // pred_region
      %s17 = ssub.s32 512, 512
      %18 = vsyncadd [#allocation3], %s17
      %s19 = sshll.u32 [#allocation2], 4
      %s20 = int_to_ptr.vmem [resolvable:$true] %s19
      %25 = dma.hbm_to_vmem [thread:$0]  %s0, 512, %s20, [#allocation3], 128, 128, 8
    $region5: #{tpu_custom_call.1} parent=1 // pred_fallthru
      _
    // Predicated region
    $region6: #{tpu_custom_call.1} parent=1 // pred_check
      _
    $region7: #{tpu_custom_call.1} parent=1 // pred_check_branch
      %27 = sbr.rel (0) target = $region9
    $region8: #{tpu_custom_call.1} parent=1 // pred_region
      _
    $region9: #{tpu_custom_call.1} parent=1 // pred_fallthru
      _
    // Predicated region
    $region10: #{tpu_custom_call.1} parent=1 // pred_check
      _
    $region11: #{tpu_custom_call.1} parent=1 // pred_check_branch
      %29 = sbr.rel (0) target = $region13
    $region12: #{tpu_custom_call.1} parent=1 // pred_region
      _
    $region13: #{tpu_custom_call.1} parent=1 // pred_fallthru
      _
    // Predicated region
    $region14: #{tpu_custom_call.1} parent=1 // pred_check
      _
    $region15: #{tpu_custom_call.1} parent=1 // pred_check_branch
      %31 = sbr.rel (0) target = $region17
    $region16: #{tpu_custom_call.1} parent=1 // pred_region
      _
    $region17: #{tpu_custom_call.1} parent=1 // pred_fallthru
      _
    // Predicated region
    $region18: #{tpu_custom_call.1} parent=1 // pred_check
      _
    $region19: #{tpu_custom_call.1} parent=1 // pred_check_branch
      %33 = sbr.rel (0) target = $region21
    $region20: #{tpu_custom_call.1} parent=1 // pred_region
      _
    $region21: #{tpu_custom_call.1} parent=1 // pred_fallthru
      _
    // Predicated region
    $region22: #{tpu_custom_call.1} parent=1 // pred_check
      _
    $region23: #{tpu_custom_call.1} parent=1 // pred_check_branch
      %35 = sbr.rel (0) target = $region25
    $region24: #{tpu_custom_call.1} parent=1 // pred_region
      _
    $region25: #{tpu_custom_call.1} parent=1 // pred_fallthru
      _
    // Predicated region
    $region26: #{tpu_custom_call.1} parent=1 // pred_check
      _
    $region27: #{tpu_custom_call.1} parent=1 // pred_check_branch
      %37 = sbr.rel (0) target = $region29
    $region28: #{tpu_custom_call.1} parent=1 // pred_region
      _
    $region29: #{tpu_custom_call.1} parent=1 // pred_fallthru
      _
    // Predicated region
    $region30: #{tpu_custom_call.1} parent=1 // pred_check
      _
    $region31: #{tpu_custom_call.1} parent=1 // pred_check_branch
      %39 = sbr.rel (0) target = $region33
    $region32: #{tpu_custom_call.1} parent=1 // pred_region
      %40 = dma.done [#allocation3], 512
    $region33: #{tpu_custom_call.1} parent=1 // pred_fallthru
      _
    %v42 = vld [vmem:[#allocation2] sm:$0xff]
    %v43 = vld [vmem:[#allocation2 + $0x8] sm:$0xff]
    %v44 = vld [vmem:[#allocation2 + $0x10] sm:$0xff]
    %v45 = vld [vmem:[#allocation2 + $0x18] sm:$0xff]
    %v46 = vpack.c.bf16 %v43, %v42
    %v47 = vpack.c.bf16 %v45, %v44
    %v48 = vld [vmem:[%s1] sm:$0xf]
    %v49 = vld [vmem:[%s1 + $0x4] sm:$0xf]
    %v50 = vld [vmem:[%s1 + $0x8] sm:$0xf]
    %v51 = vld [vmem:[%s1 + $0xc] sm:$0xf]
    %v56 = vunpack.c.l.b16 %v48
    %v57 = vunpack.c.l.b16 %v49
    %v58 = vunpack.c.l.b16 %v50
    %v59 = vunpack.c.l.b16 %v51
    %v60 = vpack.c.b16 %v57, %v56
    %v61 = vpack.c.b16 %v59, %v58
    %vm64 = vcmask 261120
    %v66 = vsel %vm64, %v46, 0
    %v69 = vsel %vm64, %v47, 0
    %71 = vmatprep.subr.bf16.mxu0 0
    %72 = vmatpush1.bf16.msra.mxu0 %v60
    %73 = vmatprep.subr.bf16.mxu0 0
    %74 = vmatpush1.bf16.msra.mxu0 %v61
    %75 = vmatprep.subr.bf16.mxu0 0
    %76 = vmatpush1.bf16.msra.mxu0 0
    %77 = vmatprep.subr.bf16.mxu0 0
    %78 = vmatpush1.bf16.msra.mxu0 0
    %79 = vmatprep.subr.bf16.mxu0 0
    %80 = vmatpush1.bf16.msra.mxu0 0
    %81 = vmatprep.subr.bf16.mxu0 0
    %82 = vmatpush1.bf16.msra.mxu0 0
    %83 = vmatprep.subr.bf16.mxu0 0
    %84 = vmatpush1.bf16.msra.mxu0 0
    %85 = vmatprep.subr.bf16.mxu0 0
    %86 = vmatpush1.bf16.msra.mxu0 0
    %87 = vmatprep.subr.bf16.mxu0 0
    %88 = vmatpush1.bf16.msra.mxu0 0
    %89 = vmatprep.subr.bf16.mxu0 0
    %90 = vmatpush1.bf16.msra.mxu0 0
    %91 = vmatprep.subr.bf16.mxu0 0
    %92 = vmatpush1.bf16.msra.mxu0 0
    %93 = vmatprep.subr.bf16.mxu0 0
    %94 = vmatpush1.bf16.msra.mxu0 0
    %95 = vmatprep.subr.bf16.mxu0 0
    %96 = vmatpush1.bf16.msra.mxu0 0
    %97 = vmatprep.subr.bf16.mxu0 0
    %98 = vmatpush1.bf16.msra.mxu0 0
    %99 = vmatprep.subr.bf16.mxu0 0
    %100 = vmatpush1.bf16.msra.mxu0 0
    %101 = vmatprep.subr.bf16.mxu0 0
    %102 = vmatpush1.bf16.msra.mxu0 0
    %103 = vmatprep.mubr.bf16.mxu0 0
    %104 = vmatmul.mubr.bf16.gmra.mrb[0].mxu0 %v66
    %v105 = vpop.f32.mrb[0].mxu0
    %v106 = vadd.f32 0.0, %v105
    %v107 = vpop.f32.mrb[0].mxu0
    %v108 = vpop.f32.mrb[0].mxu0
    %v109 = vadd.f32 0.0, %v108
    %v110 = vpop.f32.mrb[0].mxu0
    %111 = vmatprep.mubr.bf16.mxu0 0
    %112 = vmatmul.mubr.bf16.gmra.mrb[0].mxu0 %v69
    %v113 = vpop.f32.mrb[0].mxu0
    %v114 = vadd.f32 0.0, %v113
    %v115 = vpop.f32.mrb[0].mxu0
    %v116 = vpop.f32.mrb[0].mxu0
    %v117 = vadd.f32 0.0, %v116
    %v118 = vpop.f32.mrb[0].mxu0
    %119 = vdwg.mxu0
    %v120 = vld [vmem:[%s2] sm:$0x1]
    %v122 = vlaneseq
    %v123 = vshrl.u32 %v122, 7
    %v124 = vsub.s32 0, %v123
    %v125 = vrot.slane %v120, %v124
    %v127 = vadd.f32 %v106, %v125
    %v128 = vadd.f32 %v109, %v125
    %v129 = vadd.f32 %v114, %v125
    %v130 = vadd.f32 %v117, %v125
    %v131 = vld [vmem:[%s3] sm:$0xf]
    %v132 = vld [vmem:[%s3 + $0x4] sm:$0xf]
    %v133 = vpack.c.bf16 %v109, %v106
    %v134 = vpack.c.bf16 %v117, %v114
    %v137 = vunpack.c.l.b16 %v131
    %v138 = vunpack.c.l.b16 %v132
    %v139 = vpack.c.b16 %v138, %v137
    %141 = vrot.lane.b32.xlu0 %v133, 112
    %v142 = vpop.permute.xlu0 %141
    %vm144 = vcmask 130048
    %v146 = vsel %vm144, %v139, 0
    %148 = vmatprep.subr.bf16.mxu0 0
    %149 = vmatpush1.bf16.msra.mxu0 %v142
    %150 = vmatprep.subr.bf16.mxu0 0
    %151 = vmatpush1.bf16.msra.mxu0 0
    %152 = vmatprep.subr.bf16.mxu0 0
    %153 = vmatpush1.bf16.msra.mxu0 0
    %154 = vmatprep.subr.bf16.mxu0 0
    %155 = vmatpush1.bf16.msra.mxu0 0
    %156 = vmatprep.subr.bf16.mxu0 0
    %157 = vmatpush1.bf16.msra.mxu0 0
    %158 = vmatprep.subr.bf16.mxu0 0
    %159 = vmatpush1.bf16.msra.mxu0 0
    %160 = vmatprep.subr.bf16.mxu0 0
    %161 = vmatpush1.bf16.msra.mxu0 0
    %162 = vmatprep.subr.bf16.mxu0 0
    %163 = vmatpush1.bf16.msra.mxu0 0
    %164 = vmatprep.subr.bf16.mxu0 0
    %165 = vmatpush1.bf16.msra.mxu0 0
    %166 = vmatprep.subr.bf16.mxu0 0
    %167 = vmatpush1.bf16.msra.mxu0 0
    %168 = vmatprep.subr.bf16.mxu0 0
    %169 = vmatpush1.bf16.msra.mxu0 0
    %170 = vmatprep.subr.bf16.mxu0 0
    %171 = vmatpush1.bf16.msra.mxu0 0
    %172 = vmatprep.subr.bf16.mxu0 0
    %173 = vmatpush1.bf16.msra.mxu0 0
    %174 = vmatprep.subr.bf16.mxu0 0
    %175 = vmatpush1.bf16.msra.mxu0 0
    %176 = vmatprep.subr.bf16.mxu0 0
    %177 = vmatpush1.bf16.msra.mxu0 0
    %178 = vmatprep.subr.bf16.mxu0 0
    %179 = vmatpush1.bf16.msra.mxu0 0
    %180 = vmatprep.mubr.bf16.mxu0 0
    %181 = vmatmul.mubr.bf16.gmra.mrb[0].mxu0 %v146
    %v182 = vpop.f32.mrb[0].mxu0
    %v183 = vadd.f32 0.0, %v182
    %v184 = vpop.f32.mrb[0].mxu0
    %v185 = vpop.f32.mrb[0].mxu0
    %v186 = vadd.f32 0.0, %v185
    %v187 = vpop.f32.mrb[0].mxu0
    %188 = vdwg.mxu0
    %190 = vrot.lane.b32.xlu0 %v134, 112
    %v191 = vpop.permute.xlu0 %190
    %193 = vmatprep.subr.bf16.mxu0 0
    %194 = vmatpush1.bf16.msra.mxu0 %v191
    %195 = vmatprep.subr.bf16.mxu0 0
    %196 = vmatpush1.bf16.msra.mxu0 0
    %197 = vmatprep.subr.bf16.mxu0 0
    %198 = vmatpush1.bf16.msra.mxu0 0
    %199 = vmatprep.subr.bf16.mxu0 0
    %200 = vmatpush1.bf16.msra.mxu0 0
    %201 = vmatprep.subr.bf16.mxu0 0
    %202 = vmatpush1.bf16.msra.mxu0 0
    %203 = vmatprep.subr.bf16.mxu0 0
    %204 = vmatpush1.bf16.msra.mxu0 0
    %205 = vmatprep.subr.bf16.mxu0 0
    %206 = vmatpush1.bf16.msra.mxu0 0
    %207 = vmatprep.subr.bf16.mxu0 0
    %208 = vmatpush1.bf16.msra.mxu0 0
    %209 = vmatprep.subr.bf16.mxu0 0
    %210 = vmatpush1.bf16.msra.mxu0 0
    %211 = vmatprep.subr.bf16.mxu0 0
    %212 = vmatpush1.bf16.msra.mxu0 0
    %213 = vmatprep.subr.bf16.mxu0 0
    %214 = vmatpush1.bf16.msra.mxu0 0
    %215 = vmatprep.subr.bf16.mxu0 0
    %216 = vmatpush1.bf16.msra.mxu0 0
    %217 = vmatprep.subr.bf16.mxu0 0
    %218 = vmatpush1.bf16.msra.mxu0 0
    %219 = vmatprep.subr.bf16.mxu0 0
    %220 = vmatpush1.bf16.msra.mxu0 0
    %221 = vmatprep.subr.bf16.mxu0 0
    %222 = vmatpush1.bf16.msra.mxu0 0
    %223 = vmatprep.subr.bf16.mxu0 0
    %224 = vmatpush1.bf16.msra.mxu0 0
    %225 = vmatprep.mubr.bf16.mxu0 0
    %226 = vmatmul.mubr.bf16.gmra.mrb[0].mxu0 %v146
    %v227 = vpop.f32.mrb[0].mxu0
    %v228 = vadd.f32 0.0, %v227
    %v229 = vpop.f32.mrb[0].mxu0
    %v230 = vpop.f32.mrb[0].mxu0
    %v231 = vadd.f32 0.0, %v230
    %v232 = vpop.f32.mrb[0].mxu0
    %233 = vdwg.mxu0
    %v236 = vrot.slane %v183, 4
    %v237 = vrot.slane %v228, 4
    %v240 = vmax.f32 %v183, %v236
    %v241 = vmax.f32 %v228, %v237
    %v242 = vmax.f32 %v240, %v186
    %v243 = vmax.f32 %v241, %v231
    %v246 = vrot.slane %v186, 4
    %v247 = vrot.slane %v231, 4
    %v250 = vmax.f32 %v242, %v246
    %v251 = vmax.f32 %v243, %v247
    %v252 = vld [vmem:[%s4] sm:$0x1]
    %v254 = vlaneseq
    %v255 = vshrl.u32 %v254, 7
    %v256 = vsub.s32 0, %v255
    %v257 = vrot.slane %v252, %v256
    %v259 = vadd.f32 %v250, %v257
    %v260 = vadd.f32 %v251, %v257
    %v261 = vpack.c.bf16 %v259, %v259
    %v262 = vpack.c.bf16 %v260, %v260
    %v263 = vpack.c.bf16 %v128, %v127
    %v264 = vpack.c.bf16 %v130, %v129
    %v266 = vsel %vm144, %v263, 0
    %v269 = vsel %vm144, %v261, 0
    %271 = vmatprep.subr.bf16.mxu0 0
    %272 = vmatpush1.bf16.xpose.msra.mxu0 %v269
    %273 = vmatprep.subr.bf16.mxu0 0
    %274 = vmatpush1.bf16.xpose.msra.mxu0 0
    %275 = vmatprep.subr.bf16.mxu0 0
    %276 = vmatpush1.bf16.xpose.msra.mxu0 0
    %277 = vmatprep.subr.bf16.mxu0 0
    %278 = vmatpush1.bf16.xpose.msra.mxu0 0
    %279 = vmatprep.subr.bf16.mxu0 0
    %280 = vmatpush1.bf16.xpose.msra.mxu0 0
    %281 = vmatprep.subr.bf16.mxu0 0
    %282 = vmatpush1.bf16.xpose.msra.mxu0 0
    %283 = vmatprep.subr.bf16.mxu0 0
    %284 = vmatpush1.bf16.xpose.msra.mxu0 0
    %285 = vmatprep.subr.bf16.mxu0 0
    %286 = vmatpush1.bf16.xpose.msra.mxu0 0
    %287 = vmatprep.subr.bf16.mxu0 0
    %288 = vmatpush1.bf16.xpose.msra.mxu0 0
    %289 = vmatprep.subr.bf16.mxu0 0
    %290 = vmatpush1.bf16.xpose.msra.mxu0 0
    %291 = vmatprep.subr.bf16.mxu0 0
    %292 = vmatpush1.bf16.xpose.msra.mxu0 0
    %293 = vmatprep.subr.bf16.mxu0 0
    %294 = vmatpush1.bf16.xpose.msra.mxu0 0
    %295 = vmatprep.subr.bf16.mxu0 0
    %296 = vmatpush1.bf16.xpose.msra.mxu0 0
    %297 = vmatprep.subr.bf16.mxu0 0
    %298 = vmatpush1.bf16.xpose.msra.mxu0 0
    %299 = vmatprep.subr.bf16.mxu0 0
    %300 = vmatpush1.bf16.xpose.msra.mxu0 0
    %301 = vmatprep.subr.bf16.mxu0 0
    %302 = vmatpush1.bf16.xpose.msra.mxu0 0
    %303 = vmatprep.mubr.bf16.mxu0 0
    %304 = vmatmul.mubr.bf16.gmra.mrb[0].mxu0 %v266
    %v305 = vpop.f32.mrb[0].mxu0
    %v306 = vadd.f32 0.0, %v305
    %v307 = vpop.f32.mrb[0].mxu0
    %v308 = vpop.f32.mrb[0].mxu0
    %v309 = vadd.f32 0.0, %v308
    %v310 = vpop.f32.mrb[0].mxu0
    %311 = vdwg.mxu0
    %v313 = vsel %vm144, %v264, 0
    %v316 = vsel %vm144, %v262, 0
    %318 = vmatprep.subr.bf16.mxu0 0
    %319 = vmatpush1.bf16.xpose.msra.mxu0 %v316
    %320 = vmatprep.subr.bf16.mxu0 0
    %321 = vmatpush1.bf16.xpose.msra.mxu0 0
    %322 = vmatprep.subr.bf16.mxu0 0
    %323 = vmatpush1.bf16.xpose.msra.mxu0 0
    %324 = vmatprep.subr.bf16.mxu0 0
    %325 = vmatpush1.bf16.xpose.msra.mxu0 0
    %326 = vmatprep.subr.bf16.mxu0 0
    %327 = vmatpush1.bf16.xpose.msra.mxu0 0
    %328 = vmatprep.subr.bf16.mxu0 0
    %329 = vmatpush1.bf16.xpose.msra.mxu0 0
    %330 = vmatprep.subr.bf16.mxu0 0
    %331 = vmatpush1.bf16.xpose.msra.mxu0 0
    %332 = vmatprep.subr.bf16.mxu0 0
    %333 = vmatpush1.bf16.xpose.msra.mxu0 0
    %334 = vmatprep.subr.bf16.mxu0 0
    %335 = vmatpush1.bf16.xpose.msra.mxu0 0
    %336 = vmatprep.subr.bf16.mxu0 0
    %337 = vmatpush1.bf16.xpose.msra.mxu0 0
    %338 = vmatprep.subr.bf16.mxu0 0
    %339 = vmatpush1.bf16.xpose.msra.mxu0 0
    %340 = vmatprep.subr.bf16.mxu0 0
    %341 = vmatpush1.bf16.xpose.msra.mxu0 0
    %342 = vmatprep.subr.bf16.mxu0 0
    %343 = vmatpush1.bf16.xpose.msra.mxu0 0
    %344 = vmatprep.subr.bf16.mxu0 0
    %345 = vmatpush1.bf16.xpose.msra.mxu0 0
    %346 = vmatprep.subr.bf16.mxu0 0
    %347 = vmatpush1.bf16.xpose.msra.mxu0 0
    %348 = vmatprep.subr.bf16.mxu0 0
    %349 = vmatpush1.bf16.xpose.msra.mxu0 0
    %350 = vmatprep.mubr.bf16.mxu0 0
    %351 = vmatmul.mubr.bf16.gmra.mrb[0].mxu0 %v313
    %v352 = vpop.f32.mrb[0].mxu0
    %v353 = vadd.f32 0.0, %v352
    %v354 = vpop.f32.mrb[0].mxu0
    %v355 = vpop.f32.mrb[0].mxu0
    %v356 = vadd.f32 0.0, %v355
    %v357 = vpop.f32.mrb[0].mxu0
    %358 = vdwg.mxu0
    %v359 = vpack.c.bf16 %v309, %v306
    %v360 = vpack.c.bf16 %v356, %v353
    %362 = vrot.lane.b32.xlu0 %v261, 112
    %v363 = vpop.permute.xlu0 %362
    %vm364 = vcmask 31744
    %v366 = vsel %vm364, %v359, 0
    %vm368 = vcmask 1041408
    %v370 = vsel %vm368, %v363, 0
    %372 = vmatprep.subr.bf16.mxu0 0
    %373 = vmatpush1.bf16.msra.mxu0 %v370
    %374 = vmatprep.subr.bf16.mxu0 0
    %375 = vmatpush1.bf16.msra.mxu0 0
    %376 = vmatprep.subr.bf16.mxu0 0
    %377 = vmatpush1.bf16.msra.mxu0 0
    %378 = vmatprep.subr.bf16.mxu0 0
    %379 = vmatpush1.bf16.msra.mxu0 0
    %380 = vmatprep.subr.bf16.mxu0 0
    %381 = vmatpush1.bf16.msra.mxu0 0
    %382 = vmatprep.subr.bf16.mxu0 0
    %383 = vmatpush1.bf16.msra.mxu0 0
    %384 = vmatprep.subr.bf16.mxu0 0
    %385 = vmatpush1.bf16.msra.mxu0 0
    %386 = vmatprep.subr.bf16.mxu0 0
    %387 = vmatpush1.bf16.msra.mxu0 0
    %388 = vmatprep.subr.bf16.mxu0 0
    %389 = vmatpush1.bf16.msra.mxu0 0
    %390 = vmatprep.subr.bf16.mxu0 0
    %391 = vmatpush1.bf16.msra.mxu0 0
    %392 = vmatprep.subr.bf16.mxu0 0
    %393 = vmatpush1.bf16.msra.mxu0 0
    %394 = vmatprep.subr.bf16.mxu0 0
    %395 = vmatpush1.bf16.msra.mxu0 0
    %396 = vmatprep.subr.bf16.mxu0 0
    %397 = vmatpush1.bf16.msra.mxu0 0
    %398 = vmatprep.subr.bf16.mxu0 0
    %399 = vmatpush1.bf16.msra.mxu0 0
    %400 = vmatprep.subr.bf16.mxu0 0
    %401 = vmatpush1.bf16.msra.mxu0 0
    %402 = vmatprep.subr.bf16.mxu0 0
    %403 = vmatpush1.bf16.msra.mxu0 0
    %404 = vmatprep.mubr.bf16.mxu0 0
    %405 = vmatmul.mubr.bf16.gmra.mrb[0].mxu0 %v366
    %v406 = vpop.f32.mrb[0].mxu0
    %v407 = vadd.f32 0.0, %v406
    %v408 = vpop.f32.mrb[0].mxu0
    %v409 = vpop.f32.mrb[0].mxu0
    %v410 = vadd.f32 0.0, %v409
    %v411 = vpop.f32.mrb[0].mxu0
    %412 = vdwg.mxu0
    %414 = vrot.lane.b32.xlu0 %v262, 112
    %v415 = vpop.permute.xlu0 %414
    %v417 = vsel %vm364, %v360, 0
    %v420 = vsel %vm368, %v415, 0
    %422 = vmatprep.subr.bf16.mxu0 0
    %423 = vmatpush1.bf16.msra.mxu0 %v420
    %424 = vmatprep.subr.bf16.mxu0 0
    %425 = vmatpush1.bf16.msra.mxu0 0
    %426 = vmatprep.subr.bf16.mxu0 0
    %427 = vmatpush1.bf16.msra.mxu0 0
    %428 = vmatprep.subr.bf16.mxu0 0
    %429 = vmatpush1.bf16.msra.mxu0 0
    %430 = vmatprep.subr.bf16.mxu0 0
    %431 = vmatpush1.bf16.msra.mxu0 0
    %432 = vmatprep.subr.bf16.mxu0 0
    %433 = vmatpush1.bf16.msra.mxu0 0
    %434 = vmatprep.subr.bf16.mxu0 0
    %435 = vmatpush1.bf16.msra.mxu0 0
    %436 = vmatprep.subr.bf16.mxu0 0
    %437 = vmatpush1.bf16.msra.mxu0 0
    %438 = vmatprep.subr.bf16.mxu0 0
    %439 = vmatpush1.bf16.msra.mxu0 0
    %440 = vmatprep.subr.bf16.mxu0 0
    %441 = vmatpush1.bf16.msra.mxu0 0
    %442 = vmatprep.subr.bf16.mxu0 0
    %443 = vmatpush1.bf16.msra.mxu0 0
    %444 = vmatprep.subr.bf16.mxu0 0
    %445 = vmatpush1.bf16.msra.mxu0 0
    %446 = vmatprep.subr.bf16.mxu0 0
    %447 = vmatpush1.bf16.msra.mxu0 0
    %448 = vmatprep.subr.bf16.mxu0 0
    %449 = vmatpush1.bf16.msra.mxu0 0
    %450 = vmatprep.subr.bf16.mxu0 0
    %451 = vmatpush1.bf16.msra.mxu0 0
    %452 = vmatprep.subr.bf16.mxu0 0
    %453 = vmatpush1.bf16.msra.mxu0 0
    %454 = vmatprep.mubr.bf16.mxu0 0
    %455 = vmatmul.mubr.bf16.gmra.mrb[0].mxu0 %v417
    %v456 = vpop.f32.mrb[0].mxu0
    %v457 = vadd.f32 0.0, %v456
    %v458 = vpop.f32.mrb[0].mxu0
    %v459 = vpop.f32.mrb[0].mxu0
    %v460 = vadd.f32 0.0, %v459
    %v461 = vpop.f32.mrb[0].mxu0
    %462 = vdwg.mxu0
    %v463 = vpack.c.bf16 %v410, %v407
    %v464 = vpack.c.bf16 %v460, %v457
    %v465 = vld [vmem:[%s5] sm:$0xf]
    %v466 = vld [vmem:[%s5 + $0x4] sm:$0xf]
    %v467 = vld [vmem:[%s6] sm:$0x1]
    %v469 = vlaneseq
    %v470 = vshrl.u32 %v469, 7
    %v471 = vsub.s32 0, %v470
    %v472 = vrot.slane %v467, %v471
    %v476 = vunpack.c.l.b16 %v465
    %v477 = vunpack.c.l.b16 %v466
    %v478 = vpack.c.b16 %v477, %v476
    %v481 = vsel %vm144, %v463, 0
    %v484 = vsel %vm144, %v464, 0
    %486 = vmatprep.subr.bf16.mxu0 0
    %487 = vmatpush1.bf16.msra.mxu0 %v478
    %488 = vmatprep.subr.bf16.mxu0 0
    %489 = vmatpush1.bf16.msra.mxu0 0
    %490 = vmatprep.subr.bf16.mxu0 0
    %491 = vmatpush1.bf16.msra.mxu0 0
    %492 = vmatprep.subr.bf16.mxu0 0
    %493 = vmatpush1.bf16.msra.mxu0 0
    %494 = vmatprep.subr.bf16.mxu0 0
    %495 = vmatpush1.bf16.msra.mxu0 0
    %496 = vmatprep.subr.bf16.mxu0 0
    %497 = vmatpush1.bf16.msra.mxu0 0
    %498 = vmatprep.subr.bf16.mxu0 0
    %499 = vmatpush1.bf16.msra.mxu0 0
    %500 = vmatprep.subr.bf16.mxu0 0
    %501 = vmatpush1.bf16.msra.mxu0 0
    %502 = vmatprep.subr.bf16.mxu0 0
    %503 = vmatpush1.bf16.msra.mxu0 0
    %504 = vmatprep.subr.bf16.mxu0 0
    %505 = vmatpush1.bf16.msra.mxu0 0
    %506 = vmatprep.subr.bf16.mxu0 0
    %507 = vmatpush1.bf16.msra.mxu0 0
    %508 = vmatprep.subr.bf16.mxu0 0
    %509 = vmatpush1.bf16.msra.mxu0 0
    %510 = vmatprep.subr.bf16.mxu0 0
    %511 = vmatpush1.bf16.msra.mxu0 0
    %512 = vmatprep.subr.bf16.mxu0 0
    %513 = vmatpush1.bf16.msra.mxu0 0
    %514 = vmatprep.subr.bf16.mxu0 0
    %515 = vmatpush1.bf16.msra.mxu0 0
    %516 = vmatprep.subr.bf16.mxu0 0
    %517 = vmatpush1.bf16.msra.mxu0 0
    %518 = vmatprep.mubr.bf16.mxu0 0
    %519 = vmatmul.mubr.bf16.gmra.mrb[0].mxu0 %v481
    %v520 = vpop.f32.mrb[0].mxu0
    %v521 = vadd.f32 %v472, %v520
    %v522 = vpop.f32.mrb[0].mxu0
    %v523 = vpop.f32.mrb[0].mxu0
    %v524 = vadd.f32 %v472, %v523
    %v525 = vpop.f32.mrb[0].mxu0
    %526 = vmatprep.mubr.bf16.mxu0 0
    %527 = vmatmul.mubr.bf16.gmra.mrb[0].mxu0 %v484
    %v528 = vpop.f32.mrb[0].mxu0
    %v529 = vadd.f32 %v472, %v528
    %v530 = vpop.f32.mrb[0].mxu0
    %v531 = vpop.f32.mrb[0].mxu0
    %v532 = vadd.f32 %v472, %v531
    %v533 = vpop.f32.mrb[0].mxu0
    %534 = vdwg.mxu0
    %v535 = vadd.f32 %v521, %v42
    %v536 = vadd.f32 %v524, %v43
    %v537 = vadd.f32 %v529, %v44
    %v538 = vadd.f32 %v532, %v45
    %539 = vst.msk [vmem:[#allocation5] sm:$0xff] %vm64, %v535
    %540 = vst.msk [vmem:[#allocation5 + $0x8] sm:$0xff] %vm64, %v536
    %541 = vst.msk [vmem:[#allocation5 + $0x10] sm:$0xff] %vm64, %v537
    %542 = vst.msk [vmem:[#allocation5 + $0x18] sm:$0xff] %vm64, %v538
    // Predicated region
    $region34: #{tpu_custom_call.1} parent=1 // pred_check
      _
    $region35: #{tpu_custom_call.1} parent=1 // pred_check_branch
      %544 = sbr.rel (0) target = $region37
    $region36: #{tpu_custom_call.1} parent=1 // pred_region
      %s546 = ssub.s32 512, 512
      %547 = vsyncadd [#allocation4], %s546
      %s548 = sshll.u32 [#allocation5], 4
      %s549 = int_to_ptr.vmem [resolvable:$true] %s548
      %554 = dma.vmem_to_hbm [thread:$0]  %s549, 512, %s7, [#allocation4], 128, 128, 8
    $region37: #{tpu_custom_call.1} parent=1 // pred_fallthru
      _
    // Predicated region
    $region38: #{tpu_custom_call.1} parent=1 // pred_check
      _
    $region39: #{tpu_custom_call.1} parent=1 // pred_check_branch
      %556 = sbr.rel (0) target = $region41
    $region40: #{tpu_custom_call.1} parent=1 // pred_region
      %557 = dma.done [#allocation4], 512
    $region41: #{tpu_custom_call.1} parent=1 // pred_fallthru
      _
    %558 = vsyncpa [#allocation3], 1
    %559 = vsyncpa [#allocation4], 1

</llo_original>
